<compile_context>
chip_gen: v6e
topology: v6e:2x2x1
jax: 0.10.0
libtpu: 0.0.40
codegen_flags: <defaults>
</compile_context>

<pallas_src>
import functools

import numpy as np

import jax
import jax.numpy as jnp
from jax import lax
from jax.experimental import pallas as pl
from jax.experimental.pallas import tpu as pltpu

_MASK_NEG = np.float32(-1e30)   # knocks a position out of the max-pool


def _round_up(x, m):
    return ((x + m - 1) // m) * m


# --------------------------------------------------------------------------- #
# Fused kernel: Conv1d (all filter sizes) -> max-pool -> bias -> ReLU
# --------------------------------------------------------------------------- #
def _fused_conv_relu_maxpool_kernel(emb_ref, w_ref, b_ref, mask_ref, out_ref,
                                    *, chunk, n_chunks, unroll):
    """One batch tile.

    emb_ref : (S_tot, TB, C)            bf16 embedded tokens, sequence-major,
                                        zero halo / zero batch-padding rows
    w_ref   : (K_max, C, F_pad)         bf16 tap-major lane-packed conv weights
    b_ref   : (1, F_pad)                f32 lane-packed biases (resident)
    mask_ref: (n_chunks, chunk, F_pad)  f32 additive mask (0 valid / -1e30 not)
    out_ref : (TB, F_pad)               f32 pooled features (lane-dense store)
    """
    s_tot, tb, c = emb_ref.shape
    k_max = w_ref.shape[0]
    f_pad = out_ref.shape[-1]

    def chunk_body(i, pooled):
        # Conv1d for `chunk` output positions x ALL filter sizes at once:
        # K_max tap-wise MXU matmuls accumulated in f32.  Tap windows are
        # leading-axis slices of the sequence-major emb block (no relayout).
        t0 = i * chunk
        x = emb_ref[pl.ds(t0, chunk), :, :].reshape(chunk * tb, c)
        acc = jnp.dot(x, w_ref[0, :, :], preferred_element_type=jnp.float32)
        for j in range(1, k_max):                   # static tap loop, k_max small
            x = emb_ref[pl.ds(t0 + j, chunk), :, :].reshape(chunk * tb, c)
            acc = acc + jnp.dot(x, w_ref[j, :, :],
                                preferred_element_type=jnp.float32)

        # Knock out positions that are out of range for the smaller filters
        # (and the chunk round-up tail), then fold this chunk into the
        # running max over time.  TB is a multiple of 8, so the reshape and
        # the axis-0 max are sublane-aligned (pure VPU, no relayouts).
        m = mask_ref[i]                                         # (chunk, F_pad)
        masked = acc.reshape(chunk, tb, f_pad) + m[:, None, :]  # (chunk, TB, F_pad)
        return jnp.maximum(pooled, jnp.max(masked, axis=0))     # (TB, F_pad)

    init = jnp.full((tb, f_pad), _MASK_NEG, jnp.float32)
    if n_chunks == 1:
        pooled = chunk_body(0, init)
    else:
        pooled = lax.fori_loop(0, n_chunks, chunk_body, init, unroll=unroll)

    # Bias + ReLU after the pool (monotone => identical to relu-then-pool).
    out_ref[...] = jnp.maximum(pooled + b_ref[...], 0.0).astype(out_ref.dtype)


def _build_position_mask(filters, filter_nums, f_pad, s, l, l_pad, chunk):
    """(n_chunks, chunk, F_pad) additive mask: 0 where pooled position t is a
    valid conv output for the filter owning that lane, -1e30 otherwise.
    Only the last (k_max - k_min) real rows and the chunk round-up tail are
    non-zero; it is NOT replicated over the batch tile."""
    m = np.zeros((l_pad, f_pad), np.float32)
    off = 0
    for k, f in zip(filters, filter_nums):
        m[s - k + 1:l, off:off + f] = _MASK_NEG     # invalid tail for this filter
        off += f
    m[l:, :] = _MASK_NEG                            # chunk round-up padding rows
    return jnp.asarray(m.reshape(l_pad // chunk, chunk, f_pad))


# --------------------------------------------------------------------------- #
# Parameters (PyTorch layout + fused lane-packed layout)
# --------------------------------------------------------------------------- #
def init_params(key, ntoken, ninp, filters, filter_nums):
    keys = jax.random.split(key, 1 + 2 * len(filters))
    emb = 0.1 * jax.random.normal(keys[0], (ntoken, ninp), jnp.float32)
    emb = emb.at[0].set(0.0)                        # padding_idx=0

    k_max = max(filters)
    f_total = sum(filter_nums)
    f_pad = max(128, _round_up(f_total, 128))       # lane-dense output width

    w_packed = jnp.zeros((k_max, ninp, f_pad), jnp.float32)
    b_packed = jnp.zeros((1, f_pad), jnp.float32)
    convs, off = [], 0
    for i, (k, f) in enumerate(zip(filters, filter_nums)):
        # PyTorch Conv1d weight layout: (F, C_in, k), bias: (F,)
        w = 0.1 * jax.random.normal(keys[1 + 2 * i], (f, ninp, k), jnp.float32)
        b = 0.1 * jax.random.normal(keys[2 + 2 * i], (f,), jnp.float32)
        convs.append({'k': k, 'w': w, 'b': b})
        # Lane-pack: W_packed[j, c, off + f'] = W[f', c, j]   (taps j >= k stay 0)
        w_packed = w_packed.at[:k, :, off:off + f].set(jnp.transpose(w, (2, 1, 0)))
        b_packed = b_packed.at[0, off:off + f].set(b)
        off += f

    fused = dict(w_packed_bf16=w_packed.astype(jnp.bfloat16),   # bf16 MXU input
                 b_packed=b_packed,
                 filters=tuple(filters), filter_nums=tuple(filter_nums),
                 k_min=min(filters), k_max=k_max, F_total=f_total, F_pad=f_pad)
    return {'embedding': emb, 'convs': convs, 'fused': fused}


# --------------------------------------------------------------------------- #
# Forward pass
# --------------------------------------------------------------------------- #
def cnn_forward(params, inp, *, tb=None, chunk=None):
    """inp: (S, B) int32 token ids. Returns (outp (B, sum F_i), emb (B, C, S))."""
    fused = params['fused']
    filters, filter_nums = fused['filters'], fused['filter_nums']
    k_min, k_max = fused['k_min'], fused['k_max']
    f_total, f_pad = fused['F_total'], fused['F_pad']

    S, B = inp.shape
    C = params['embedding'].shape[1]
    assert S >= k_max, "sequence shorter than the largest conv filter"
    L = S - k_min + 1                    # pooled positions (smallest filter)

    # ---- batch tile: multiple of 8, large enough to feed the MXU, and >= 2
    #      grid steps when the batch allows (megacore / v7x 2-TC sharding) ----
    B8 = _round_up(B, 8)
    if tb is None:
        tb = min(64, B8)                 # VMEM-safe default on v5e/v6e/v7x
        if B8 // tb < 2 and B8 >= 16:
            tb = _round_up(B8 // 2, 8)   # prefer at least 2 grid steps
    tb = max(8, _round_up(tb, 8))
    B_pad = _round_up(B, tb)
    grid_b = B_pad // tb

    # ---- time chunking: bounds live vregs to chunk*TB rows; target ~256
    #      MXU rows per matmul ----
    if chunk is None:
        chunk = max(1, min(L, max(1, 256 // tb)))
    chunk = max(1, min(chunk, L))
    L_pad = _round_up(L, chunk)
    n_chunks = L_pad // chunk
    unroll = n_chunks <= 4
    S_tot = L_pad + k_max - 1            # tap halo + chunk round-up

    # Pad the TOKEN IDS (id 0 -> all-zero embedding row), not the embedded
    # tensor, so the halo / batch padding comes straight out of the gather.
    inp_pad = jnp.pad(inp.astype(jnp.int32), ((0, S_tot - S), (0, B_pad - B)))
    emb_sbc = params['embedding'][inp_pad]                      # (S_tot, B_pad, C) f32
    emb_in = emb_sbc.astype(jnp.bfloat16)                       # bf16 matmul input

    mask = _build_position_mask(filters, filter_nums, f_pad, S, L, L_pad, chunk)

    kernel = functools.partial(_fused_conv_relu_maxpool_kernel,
                               chunk=chunk, n_chunks=n_chunks, unroll=unroll)

    cost = pl.CostEstimate(
        flops=int(2 * B_pad * C * sum((S - k + 1) * k * f
                                      for k, f in zip(filters, filter_nums))),
        transcendentals=0,
        bytes_accessed=int(2 * S_tot * B_pad * C        # emb (bf16)
                           + 2 * k_max * C * f_pad      # weights (bf16)
                           + 4 * f_pad                  # bias
                           + 4 * L_pad * f_pad          # mask
                           + 4 * B_pad * f_pad))        # output

    out_pad = pl.pallas_call(
        kernel,
        out_shape=jax.ShapeDtypeStruct((B_pad, f_pad), jnp.float32),
        grid=(grid_b,),
        in_specs=[
            # batch-tiled emb (only block that actually pipelines)
            pl.BlockSpec((S_tot, tb, C), lambda b: (0, b, 0)),
            pl.BlockSpec((k_max, C, f_pad), lambda b: (0, 0, 0)),       # resident weights
            pl.BlockSpec((1, f_pad), lambda b: (0, 0)),                 # resident bias
            pl.BlockSpec((n_chunks, chunk, f_pad), lambda b: (0, 0, 0)),  # resident mask
        ],
        out_specs=pl.BlockSpec((tb, f_pad), lambda b: (b, 0)),          # lane-dense output
        compiler_params=pltpu.CompilerParams(
            dimension_semantics=("parallel",),          # shard batch tiles across TCs
            vmem_limit_bytes=32 * 1024 * 1024),         # safe on v5e/v6e/v7x
        cost_estimate=cost,
    )(emb_in, fused['w_packed_bf16'], fused['b_packed'], mask)

    outp = out_pad[:B, :f_total]
    # Module's auxiliary return value: emb.permute(1, 2, 0)  (single XLA slice +
    # permute of the f32 gather; the kernel never needs a transposed copy).
    emb_bcs = jnp.transpose(emb_sbc[:S, :B, :], (1, 2, 0))      # (B, C, S)
    return outp, emb_bcs


# --------------------------------------------------------------------------- #
# Pure-JAX reference matching PyTorch Conv1d / ReLU / MaxPool1d semantics (f32)
# --------------------------------------------------------------------------- #
def reference_forward(params, inp):
    emb_sbc = params['embedding'][inp]
    emb_bcs = jnp.transpose(emb_sbc, (1, 2, 0))     # (B, C, S)
    B, C, S = emb_bcs.shape
    outs = []
    for conv in params['convs']:
        k, W, b = conv['k'], conv['w'], conv['b']
        l_out = S - k + 1
        taps = jnp.stack([emb_bcs[:, :, j:j + l_out] for j in range(k)], axis=2)  # (B, C, k, l_out)
        cr = jnp.einsum('bckt,fck->bft', taps, W) + b[None, :, None]              # (B, F, l_out)
        cr = jnp.maximum(cr, 0.0)
        outs.append(jnp.max(cr, axis=2))                                          # (B, F)
    return jnp.concatenate(outs, axis=1), emb_bcs


if __name__ == "__main__":
    key = jax.random.PRNGKey(0)

    def run_case(config, S, B, case_key, chunk=None, tb=None):
        kp, ki = jax.random.split(case_key)
        params = init_params(kp, config['ntoken'], config['ninp'],
                             config['filters'], config['filter_nums'])
        inp = jax.random.randint(ki, (S, B), 0, config['ntoken'], dtype=jnp.int32)

        outp, emb = cnn_forward(params, inp, tb=tb, chunk=chunk)
        outp = jax.block_until_ready(outp)
        emb = jax.block_until_ready(emb)

        ref_outp, ref_emb = reference_forward(params, inp)
        assert outp.shape == (B, sum(config['filter_nums']))
        assert emb.shape == (B, config['ninp'], S)
        # bf16 matmul inputs (f32 accumulation) -> loosened tolerance vs the
        # pure-f32 PyTorch-equivalent reference.
        assert jnp.allclose(outp, ref_outp, atol=2e-2, rtol=2e-2), \
            float(jnp.max(jnp.abs(outp - ref_outp)))
        assert jnp.allclose(emb, ref_emb)

    k1, k2 = jax.random.split(key)

    # 1) module's small demo shapes: single time chunk, single grid step
    run_case({'ntoken': 50, 'ninp': 32, 'filters': [2, 3],
              'filter_nums': [16, 16], 'dropout': 0.0},
             S=8, B=2, case_key=k1)

    # 2) multi-chunk time loop + 2 grid steps (megacore path) + batch padding
    run_case({'ntoken': 50, 'ninp': 32, 'filters': [2, 3, 4],
              'filter_nums': [16, 16, 16], 'dropout': 0.0},
             S=12, B=24, case_key=k2, chunk=4)

    print("KERNEL_OK")
</pallas_src>

<mosaic_0001>
module attributes {stable_mosaic.version = 11 : i64} {
  func.func @_fused_conv_relu_maxpool_kernel(%arg0: i32, %arg1: memref<9x8x32xbf16, #tpu.memory_space<vmem>>, %arg2: memref<3x32x128xbf16, #tpu.memory_space<vmem>>, %arg3: memref<1x128xf32, #tpu.memory_space<vmem>>, %arg4: memref<1x7x128xf32, #tpu.memory_space<vmem>>, %arg5: memref<8x128xf32, #tpu.memory_space<vmem>>) attributes {dimension_semantics = [#tpu.dimension_semantics<parallel>], iteration_bounds = array<i64: 1>, scalar_prefetch = 0 : i64, scratch_operands = 0 : i64, tpu.core_type = #tpu.core_type<tc>, window_params = [{transform_indices = @transform_0, window_bounds = array<i64: 9, 8, 32>}, {pipeline_mode = #tpu.pipeline_mode<synchronous>, transform_indices = @transform_1, window_bounds = array<i64: 3, 32, 128>}, {pipeline_mode = #tpu.pipeline_mode<synchronous>, transform_indices = @transform_2, window_bounds = array<i64: 1, 128>}, {pipeline_mode = #tpu.pipeline_mode<synchronous>, transform_indices = @transform_3, window_bounds = array<i64: 1, 7, 128>}, {transform_indices = @transform_4, window_bounds = array<i64: 8, 128>}]} {
    %cst = arith.constant -1.000000e+30 : f32
    %0 = vector.broadcast %cst : f32 to vector<8x128xf32>
    %c0 = arith.constant 0 : index
    %c0_0 = arith.constant 0 : index
    %c0_1 = arith.constant 0 : index
    %1 = vector.load %arg1[%c0, %c0_0, %c0_1] : memref<9x8x32xbf16, #tpu.memory_space<vmem>>, vector<7x8x32xbf16>
    %2 = vector.shape_cast %1 : vector<7x8x32xbf16> to vector<56x32xbf16>
    %c0_2 = arith.constant 0 : index
    %c0_3 = arith.constant 0 : index
    %c0_4 = arith.constant 0 : index
    %3 = vector.load %arg2[%c0_2, %c0_3, %c0_4] : memref<3x32x128xbf16, #tpu.memory_space<vmem>>, vector<1x32x128xbf16>
    %4 = vector.shape_cast %3 : vector<1x32x128xbf16> to vector<32x128xbf16>
    %cst_5 = arith.constant dense<0.000000e+00> : vector<56x128xf32>
    %5 = tpu.matmul %2, %4, %cst_5 {dimension_numbers = #tpu.dot_dimension_numbers<[1], [0], [0], [1], [0, 0, 1, 1], [], []>} : vector<56x32xbf16>, vector<32x128xbf16>, vector<56x128xf32> -> vector<56x128xf32>
    %c1 = arith.constant 1 : index
    %c0_6 = arith.constant 0 : index
    %c0_7 = arith.constant 0 : index
    %6 = vector.load %arg1[%c1, %c0_6, %c0_7] : memref<9x8x32xbf16, #tpu.memory_space<vmem>>, vector<7x8x32xbf16>
    %7 = vector.shape_cast %6 : vector<7x8x32xbf16> to vector<56x32xbf16>
    %c1_8 = arith.constant 1 : index
    %c0_9 = arith.constant 0 : index
    %c0_10 = arith.constant 0 : index
    %8 = vector.load %arg2[%c1_8, %c0_9, %c0_10] : memref<3x32x128xbf16, #tpu.memory_space<vmem>>, vector<1x32x128xbf16>
    %9 = vector.shape_cast %8 : vector<1x32x128xbf16> to vector<32x128xbf16>
    %cst_11 = arith.constant dense<0.000000e+00> : vector<56x128xf32>
    %10 = tpu.matmul %7, %9, %cst_11 {dimension_numbers = #tpu.dot_dimension_numbers<[1], [0], [0], [1], [0, 0, 1, 1], [], []>} : vector<56x32xbf16>, vector<32x128xbf16>, vector<56x128xf32> -> vector<56x128xf32>
    %11 = arith.addf %5, %10 : vector<56x128xf32>
    %c2 = arith.constant 2 : index
    %c0_12 = arith.constant 0 : index
    %c0_13 = arith.constant 0 : index
    %12 = vector.load %arg1[%c2, %c0_12, %c0_13] : memref<9x8x32xbf16, #tpu.memory_space<vmem>>, vector<7x8x32xbf16>
    %13 = vector.shape_cast %12 : vector<7x8x32xbf16> to vector<56x32xbf16>
    %c2_14 = arith.constant 2 : index
    %c0_15 = arith.constant 0 : index
    %c0_16 = arith.constant 0 : index
    %14 = vector.load %arg2[%c2_14, %c0_15, %c0_16] : memref<3x32x128xbf16, #tpu.memory_space<vmem>>, vector<1x32x128xbf16>
    %15 = vector.shape_cast %14 : vector<1x32x128xbf16> to vector<32x128xbf16>
    %cst_17 = arith.constant dense<0.000000e+00> : vector<56x128xf32>
    %16 = tpu.matmul %13, %15, %cst_17 {dimension_numbers = #tpu.dot_dimension_numbers<[1], [0], [0], [1], [0, 0, 1, 1], [], []>} : vector<56x32xbf16>, vector<32x128xbf16>, vector<56x128xf32> -> vector<56x128xf32>
    %17 = arith.addf %11, %16 : vector<56x128xf32>
    %c0_18 = arith.constant 0 : index
    %c0_19 = arith.constant 0 : index
    %c0_20 = arith.constant 0 : index
    %18 = vector.load %arg4[%c0_18, %c0_19, %c0_20] : memref<1x7x128xf32, #tpu.memory_space<vmem>>, vector<1x7x128xf32>
    %19 = vector.shape_cast %18 : vector<1x7x128xf32> to vector<7x128xf32>
    %20 = vector.shape_cast %17 : vector<56x128xf32> to vector<7x8x128xf32>
    %21 = vector.shape_cast %19 : vector<7x128xf32> to vector<7x1x128xf32>
    %22 = vector.broadcast %21 : vector<7x1x128xf32> to vector<7x8x128xf32>
    %23 = arith.addf %20, %22 : vector<7x8x128xf32>
    %cst_21 = arith.constant dense<0xFF800000> : vector<8x128xf32>
    %24 = vector.multi_reduction <maximumf>, %23, %cst_21 [0] : vector<7x8x128xf32> to vector<8x128xf32>
    %25 = arith.maximumf %0, %24 : vector<8x128xf32>
    %c0_22 = arith.constant 0 : index
    %c0_23 = arith.constant 0 : index
    %26 = vector.load %arg3[%c0_22, %c0_23] : memref<1x128xf32, #tpu.memory_space<vmem>>, vector<1x128xf32>
    %27 = vector.broadcast %26 : vector<1x128xf32> to vector<8x128xf32>
    %28 = arith.addf %25, %27 : vector<8x128xf32>
    %cst_24 = arith.constant 0.000000e+00 : f32
    %29 = vector.broadcast %cst_24 : f32 to vector<8x128xf32>
    %30 = arith.maximumf %28, %29 : vector<8x128xf32>
    %c0_25 = arith.constant 0 : index
    %c0_26 = arith.constant 0 : index
    %31 = vector.load %arg5[%c0_25, %c0_26] : memref<8x128xf32, #tpu.memory_space<vmem>>, vector<8x128xf32>
    tpu.vector_store %arg5[%c0_25, %c0_26], %30 {strides = array<i32>} : memref<8x128xf32, #tpu.memory_space<vmem>>, vector<8x128xf32>,
    return
  }
  func.func @transform_0(%arg0: i32) -> (i32, i32, i32) {
    %c0_i32 = arith.constant 0 : i32
    %c0_i32_0 = arith.constant 0 : i32
    %c0_i32_1 = arith.constant 0 : i32
    return %c0_i32, %arg0, %c0_i32_0 : i32, i32, i32
  }
  func.func @transform_1(%arg0: i32) -> (i32, i32, i32) {
    %c0_i32 = arith.constant 0 : i32
    %c0_i32_0 = arith.constant 0 : i32
    %c0_i32_1 = arith.constant 0 : i32
    %c0_i32_2 = arith.constant 0 : i32
    return %c0_i32, %c0_i32_0, %c0_i32_1 : i32, i32, i32
  }
  func.func @transform_2(%arg0: i32) -> (i32, i32) {
    %c0_i32 = arith.constant 0 : i32
    %c0_i32_0 = arith.constant 0 : i32
    %c0_i32_1 = arith.constant 0 : i32
    return %c0_i32, %c0_i32_0 : i32, i32
  }
  func.func @transform_3(%arg0: i32) -> (i32, i32, i32) {
    %c0_i32 = arith.constant 0 : i32
    %c0_i32_0 = arith.constant 0 : i32
    %c0_i32_1 = arith.constant 0 : i32
    %c0_i32_2 = arith.constant 0 : i32
    return %c0_i32, %c0_i32_0, %c0_i32_1 : i32, i32, i32
  }
  func.func @transform_4(%arg0: i32) -> (i32, i32) {
    %c0_i32 = arith.constant 0 : i32
    %c0_i32_0 = arith.constant 0 : i32
    return %arg0, %c0_i32 : i32, i32
  }
}

</mosaic_0001>

<llo_original>
// kernel: tpu_custom_call.1
$region0: #{tpu_custom_call.1}
  #allocation0 [shape = 'u32[]', space=smem, size = 0x4, offset = 0x4, fixed_abs, tag = 'smem constant byte address 0x4 - core index']
  #allocation1 [shape = 'u32[144,128]{1,0:T(1,128)}', space=vmem, size = 0x12000, scoped, tag = 'internal scratch']
  %s0 = inlined_call_operand.hbm [shape: bf16[9,8,32], index: 0, kind: input, shape index: {}]
  %s1 = inlined_call_operand.hbm [shape: bf16[3,32,128], index: 1, kind: input, shape index: {}]
  %s2 = inlined_call_operand.vmem [shape: f32[1,128], index: 2, kind: input, shape index: {}]
  %s3 = inlined_call_operand.vmem [shape: f32[1,7,128], index: 3, kind: input, shape index: {}]
  %s4 = inlined_call_operand.hbm [shape: f32[8,128], index: 4, kind: output, shape index: {}]
  %s5 = sld [smem:[#allocation0]]
  $region34: #{tpu_custom_call.1} parent=0
    _
  %s7 = ssub.s32 1, %s5
  %s8 = scalar_select 0, %s7, %s5
  $region1: #{tpu_custom_call.1} parent=0
    #allocation2 [shape = 'u8[18432]{0}', space=vmem, size = 0x4800, scoped, tag = 'input window, operand 0, single buffered']
    #allocation3 [shape = 's32[1]{0}', space=sflag, size = 0x4, scoped, tag = 'scoped memory for tpu_custom_call.1']
    #allocation4 [shape = 's32[1]{0}', space=sflag, size = 0x4, scoped, tag = 'scoped memory for tpu_custom_call.1']
    #allocation5 [shape = 'u8[24576]{0}', space=vmem, size = 0x6000, scoped, tag = 'input window, operand 1, single buffered']
    #allocation6 [shape = 's32[1]{0}', space=sflag, size = 0x4, scoped, tag = 'scoped memory for tpu_custom_call.1']
    #allocation7 [shape = 'u8[4096]{0}', space=vmem, size = 0x1000, scoped, tag = 'output window, operand 0, single buffered']
    %9 = vsyncpa [#allocation3], 0
    %10 = vsyncpa [#allocation6], 0
    %11 = vsyncpa [#allocation4], 0
    // Predicated region
    $region2: #{tpu_custom_call.1} parent=1 // pred_check
      _
    $region3: #{tpu_custom_call.1} parent=1 // pred_check_branch
      %13 = sbr.rel (0) target = $region5
    $region4: #{tpu_custom_call.1} parent=1 // pred_region
      %s15 = ssub.s32 576, 576
      %16 = vsyncadd [#allocation3], %s15
      %s17 = sshll.u32 [#allocation2], 4
      %s18 = int_to_ptr.vmem [resolvable:$true] %s17
      %23 = dma.hbm_to_vmem [thread:$0]  %s0, 576, %s18, [#allocation3], 64, 64, 4
    $region5: #{tpu_custom_call.1} parent=1 // pred_fallthru
      _
    // Predicated region
    $region6: #{tpu_custom_call.1} parent=1 // pred_check
      _
    $region7: #{tpu_custom_call.1} parent=1 // pred_check_branch
      %25 = sbr.rel (0) target = $region9
    $region8: #{tpu_custom_call.1} parent=1 // pred_region
      %s27 = ssub.s32 768, 768
      %28 = vsyncadd [#allocation6], %s27
      %s29 = sshll.u32 [#allocation5], 4
      %s30 = int_to_ptr.vmem [resolvable:$true] %s29
      %35 = dma.hbm_to_vmem [thread:$0]  %s1, 768, %s30, [#allocation6], 64, 64, 4
    $region9: #{tpu_custom_call.1} parent=1 // pred_fallthru
      _
    // Predicated region
    $region10: #{tpu_custom_call.1} parent=1 // pred_check
      _
    $region11: #{tpu_custom_call.1} parent=1 // pred_check_branch
      %37 = sbr.rel (0) target = $region13
    $region12: #{tpu_custom_call.1} parent=1 // pred_region
      _
    $region13: #{tpu_custom_call.1} parent=1 // pred_fallthru
      _
    // Predicated region
    $region14: #{tpu_custom_call.1} parent=1 // pred_check
      _
    $region15: #{tpu_custom_call.1} parent=1 // pred_check_branch
      %39 = sbr.rel (0) target = $region17
    $region16: #{tpu_custom_call.1} parent=1 // pred_region
      _
    $region17: #{tpu_custom_call.1} parent=1 // pred_fallthru
      _
    // Predicated region
    $region18: #{tpu_custom_call.1} parent=1 // pred_check
      _
    $region19: #{tpu_custom_call.1} parent=1 // pred_check_branch
      %41 = sbr.rel (0) target = $region21
    $region20: #{tpu_custom_call.1} parent=1 // pred_region
      %42 = dma.done [#allocation3], 576
    $region21: #{tpu_custom_call.1} parent=1 // pred_fallthru
      _
    // Predicated region
    $region22: #{tpu_custom_call.1} parent=1 // pred_check
      _
    $region23: #{tpu_custom_call.1} parent=1 // pred_check_branch
      %44 = sbr.rel (0) target = $region25
    $region24: #{tpu_custom_call.1} parent=1 // pred_region
      %45 = dma.done [#allocation6], 768
    $region25: #{tpu_custom_call.1} parent=1 // pred_fallthru
      _
    %v47 = vld [vmem:[#allocation2] sm:$0xf]
    %v48 = vld [vmem:[#allocation2 + $0x4] sm:$0xf]
    %v49 = vld [vmem:[#allocation2 + $0x8] sm:$0xf]
    %v50 = vld [vmem:[#allocation2 + $0xc] sm:$0xf]
    %v51 = vld [vmem:[#allocation2 + $0x10] sm:$0xf]
    %v52 = vld [vmem:[#allocation2 + $0x14] sm:$0xf]
    %v53 = vld [vmem:[#allocation2 + $0x18] sm:$0xf]
    %v54 = vld [vmem:[#allocation5] sm:$0xf]
    %v55 = vld [vmem:[#allocation5 + $0x4] sm:$0xf]
    %v56 = vld [vmem:[#allocation5 + $0x8] sm:$0xf]
    %v57 = vld [vmem:[#allocation5 + $0xc] sm:$0xf]
    %s58 = scalar_lea.vmem [#allocation2], 4
    %v59 = vld [vmem:[%s58] sm:$0xf]
    %v60 = vld [vmem:[%s58 + $0x4] sm:$0xf]
    %v61 = vld [vmem:[%s58 + $0x8] sm:$0xf]
    %v62 = vld [vmem:[%s58 + $0xc] sm:$0xf]
    %v63 = vld [vmem:[%s58 + $0x10] sm:$0xf]
    %v64 = vld [vmem:[%s58 + $0x14] sm:$0xf]
    %v65 = vld [vmem:[%s58 + $0x18] sm:$0xf]
    %s66 = scalar_lea.vmem [#allocation5], 16
    %v67 = vld [vmem:[%s66] sm:$0xf]
    %v68 = vld [vmem:[%s66 + $0x4] sm:$0xf]
    %v69 = vld [vmem:[%s66 + $0x8] sm:$0xf]
    %v70 = vld [vmem:[%s66 + $0xc] sm:$0xf]
    %v78 = vunpack.c.l.b16 %v59
    %v79 = vunpack.c.l.b16 %v60
    %v80 = vunpack.c.l.b16 %v61
    %v81 = vunpack.c.l.b16 %v62
    %v82 = vunpack.c.l.b16 %v63
    %v83 = vunpack.c.l.b16 %v64
    %v84 = vunpack.c.l.b16 %v65
    %v85 = vpack.c.b16 %v79, %v78
    %v86 = vpack.c.b16 %v81, %v80
    %v87 = vpack.c.b16 %v83, %v82
    %v88 = vpack.c.b16 %v84, %v84
    %v93 = vunpack.c.l.b16 %v67
    %v94 = vunpack.c.l.b16 %v68
    %v95 = vunpack.c.l.b16 %v69
    %v96 = vunpack.c.l.b16 %v70
    %v97 = vpack.c.b16 %v94, %v93
    %v98 = vpack.c.b16 %v96, %v95
    %vm101 = vcmask 261120
    %v103 = vsel %vm101, %v85, 0
    %v106 = vsel %vm101, %v86, 0
    %v109 = vsel %vm101, %v87, 0
    %v112 = vsel %vm101, %v88, 0
    %114 = vmatprep.subr.bf16.mxu0 0
    %115 = vmatpush1.bf16.msra.mxu0 0
    %116 = vmatprep.subr.bf16.mxu0 0
    %117 = vmatpush1.bf16.msra.mxu0 0
    %118 = vmatprep.subr.bf16.mxu0 0
    %119 = vmatpush1.bf16.msra.mxu0 0
    %120 = vmatprep.subr.bf16.mxu0 0
    %121 = vmatpush1.bf16.msra.mxu0 0
    %122 = vmatprep.subr.bf16.mxu0 0
    %123 = vmatpush1.bf16.msra.mxu0 0
    %124 = vmatprep.subr.bf16.mxu0 0
    %125 = vmatpush1.bf16.msra.mxu0 0
    %126 = vmatprep.subr.bf16.mxu0 0
    %127 = vmatpush1.bf16.msra.mxu0 %v98
    %128 = vmatprep.subr.bf16.mxu0 0
    %129 = vmatpush1.bf16.msra.mxu0 %v97
    %130 = vmatprep.subr.bf16.mxu0 0
    %131 = vmatpush2.bf16.msra.mxu0 0
    %132 = vmatprep.subr.bf16.mxu0 0
    %133 = vmatpush2.bf16.msra.mxu0 0
    %134 = vmatprep.subr.bf16.mxu0 0
    %135 = vmatpush2.bf16.msra.mxu0 0
    %136 = vmatprep.subr.bf16.mxu0 0
    %137 = vmatpush2.bf16.msra.mxu0 0
    %138 = vmatprep.subr.bf16.mxu0 0
    %139 = vmatpush2.bf16.msra.mxu0 0
    %140 = vmatprep.subr.bf16.mxu0 0
    %141 = vmatpush2.bf16.msra.mxu0 0
    %142 = vmatprep.subr.bf16.mxu0 0
    %143 = vmatpush2.bf16.msra.mxu0 0
    %144 = vmatprep.subr.bf16.mxu0 0
    %145 = vmatpush2.bf16.msra.mxu0 0
    %146 = vmatprep.mubr.bf16.mxu0 0
    %147 = vmatmul.mubr.bf16.gmra.mxu0 %v103
    %v148 = vpop.f32.mrf.mxu0
    %v149 = vadd.f32 0.0, %v148
    %v150 = vpop.f32.mrf.mxu0
    %v151 = vpop.f32.mrf.mxu0
    %v152 = vadd.f32 0.0, %v151
    %v153 = vpop.f32.mrf.mxu0
    %154 = vmatprep.mubr.bf16.mxu0 0
    %155 = vmatmul.mubr.bf16.gmra.mxu0 %v106
    %v156 = vpop.f32.mrf.mxu0
    %v157 = vadd.f32 0.0, %v156
    %v158 = vpop.f32.mrf.mxu0
    %v159 = vpop.f32.mrf.mxu0
    %v160 = vadd.f32 0.0, %v159
    %v161 = vpop.f32.mrf.mxu0
    %162 = vmatprep.mubr.bf16.mxu0 0
    %163 = vmatmul.mubr.bf16.gmra.mxu0 %v109
    %v164 = vpop.f32.mrf.mxu0
    %v165 = vadd.f32 0.0, %v164
    %v166 = vpop.f32.mrf.mxu0
    %v167 = vpop.f32.mrf.mxu0
    %v168 = vadd.f32 0.0, %v167
    %v169 = vpop.f32.mrf.mxu0
    %170 = vmatprep.mubr.bf16.mxu0 0
    %171 = vmatmul.mubr.bf16.gmra.mxu0 %v112
    %v172 = vpop.f32.mrf.mxu0
    %v173 = vadd.f32 0.0, %v172
    %v174 = vpop.f32.mrf.mxu0
    %v175 = vpop.f32.mrf.mxu0
    %v176 = vpop.f32.mrf.mxu0
    %177 = vdwg.mxu0
    %v185 = vunpack.c.l.b16 %v47
    %v186 = vunpack.c.l.b16 %v48
    %v187 = vunpack.c.l.b16 %v49
    %v188 = vunpack.c.l.b16 %v50
    %v189 = vunpack.c.l.b16 %v51
    %v190 = vunpack.c.l.b16 %v52
    %v191 = vunpack.c.l.b16 %v53
    %v192 = vpack.c.b16 %v186, %v185
    %v193 = vpack.c.b16 %v188, %v187
    %v194 = vpack.c.b16 %v190, %v189
    %v195 = vpack.c.b16 %v191, %v191
    %v200 = vunpack.c.l.b16 %v54
    %v201 = vunpack.c.l.b16 %v55
    %v202 = vunpack.c.l.b16 %v56
    %v203 = vunpack.c.l.b16 %v57
    %v204 = vpack.c.b16 %v201, %v200
    %v205 = vpack.c.b16 %v203, %v202
    %v209 = vsel %vm101, %v192, 0
    %v212 = vsel %vm101, %v193, 0
    %v215 = vsel %vm101, %v194, 0
    %v218 = vsel %vm101, %v195, 0
    %220 = vmatprep.subr.bf16.mxu0 0
    %221 = vmatpush1.bf16.msra.mxu0 0
    %222 = vmatprep.subr.bf16.mxu0 0
    %223 = vmatpush1.bf16.msra.mxu0 0
    %224 = vmatprep.subr.bf16.mxu0 0
    %225 = vmatpush1.bf16.msra.mxu0 0
    %226 = vmatprep.subr.bf16.mxu0 0
    %227 = vmatpush1.bf16.msra.mxu0 0
    %228 = vmatprep.subr.bf16.mxu0 0
    %229 = vmatpush1.bf16.msra.mxu0 0
    %230 = vmatprep.subr.bf16.mxu0 0
    %231 = vmatpush1.bf16.msra.mxu0 0
    %232 = vmatprep.subr.bf16.mxu0 0
    %233 = vmatpush1.bf16.msra.mxu0 %v205
    %234 = vmatprep.subr.bf16.mxu0 0
    %235 = vmatpush1.bf16.msra.mxu0 %v204
    %236 = vmatprep.subr.bf16.mxu0 0
    %237 = vmatpush2.bf16.msra.mxu0 0
    %238 = vmatprep.subr.bf16.mxu0 0
    %239 = vmatpush2.bf16.msra.mxu0 0
    %240 = vmatprep.subr.bf16.mxu0 0
    %241 = vmatpush2.bf16.msra.mxu0 0
    %242 = vmatprep.subr.bf16.mxu0 0
    %243 = vmatpush2.bf16.msra.mxu0 0
    %244 = vmatprep.subr.bf16.mxu0 0
    %245 = vmatpush2.bf16.msra.mxu0 0
    %246 = vmatprep.subr.bf16.mxu0 0
    %247 = vmatpush2.bf16.msra.mxu0 0
    %248 = vmatprep.subr.bf16.mxu0 0
    %249 = vmatpush2.bf16.msra.mxu0 0
    %250 = vmatprep.subr.bf16.mxu0 0
    %251 = vmatpush2.bf16.msra.mxu0 0
    %252 = vmatprep.mubr.bf16.mxu0 0
    %253 = vmatmul.mubr.bf16.gmra.mxu0 %v209
    %v254 = vpop.f32.mrf.mxu0
    %v255 = vadd.f32 %v149, %v254
    %v256 = vpop.f32.mrf.mxu0
    %v257 = vpop.f32.mrf.mxu0
    %v258 = vadd.f32 %v152, %v257
    %v259 = vpop.f32.mrf.mxu0
    %260 = vmatprep.mubr.bf16.mxu0 0
    %261 = vmatmul.mubr.bf16.gmra.mxu0 %v212
    %v262 = vpop.f32.mrf.mxu0
    %v263 = vadd.f32 %v157, %v262
    %v264 = vpop.f32.mrf.mxu0
    %v265 = vpop.f32.mrf.mxu0
    %v266 = vadd.f32 %v160, %v265
    %v267 = vpop.f32.mrf.mxu0
    %268 = vmatprep.mubr.bf16.mxu0 0
    %269 = vmatmul.mubr.bf16.gmra.mxu0 %v215
    %v270 = vpop.f32.mrf.mxu0
    %v271 = vadd.f32 %v165, %v270
    %v272 = vpop.f32.mrf.mxu0
    %v273 = vpop.f32.mrf.mxu0
    %v274 = vadd.f32 %v168, %v273
    %v275 = vpop.f32.mrf.mxu0
    %276 = vmatprep.mubr.bf16.mxu0 0
    %277 = vmatmul.mubr.bf16.gmra.mxu0 %v218
    %v278 = vpop.f32.mrf.mxu0
    %v279 = vadd.f32 %v173, %v278
    %v280 = vpop.f32.mrf.mxu0
    %v281 = vpop.f32.mrf.mxu0
    %v282 = vpop.f32.mrf.mxu0
    %283 = vdwg.mxu0
    %s284 = scalar_lea.vmem [#allocation2], 8
    %v285 = vld [vmem:[%s284] sm:$0xf]
    %v286 = vld [vmem:[%s284 + $0x4] sm:$0xf]
    %v287 = vld [vmem:[%s284 + $0x8] sm:$0xf]
    %v288 = vld [vmem:[%s284 + $0xc] sm:$0xf]
    %v289 = vld [vmem:[%s284 + $0x10] sm:$0xf]
    %v290 = vld [vmem:[%s284 + $0x14] sm:$0xf]
    %v291 = vld [vmem:[%s284 + $0x18] sm:$0xf]
    %s292 = scalar_lea.vmem [#allocation5], 32
    %v293 = vld [vmem:[%s292] sm:$0xf]
    %v294 = vld [vmem:[%s292 + $0x4] sm:$0xf]
    %v295 = vld [vmem:[%s292 + $0x8] sm:$0xf]
    %v296 = vld [vmem:[%s292 + $0xc] sm:$0xf]
    %v304 = vunpack.c.l.b16 %v285
    %v305 = vunpack.c.l.b16 %v286
    %v306 = vunpack.c.l.b16 %v287
    %v307 = vunpack.c.l.b16 %v288
    %v308 = vunpack.c.l.b16 %v289
    %v309 = vunpack.c.l.b16 %v290
    %v310 = vunpack.c.l.b16 %v291
    %v311 = vpack.c.b16 %v305, %v304
    %v312 = vpack.c.b16 %v307, %v306
    %v313 = vpack.c.b16 %v309, %v308
    %v314 = vpack.c.b16 %v310, %v310
    %v319 = vunpack.c.l.b16 %v293
    %v320 = vunpack.c.l.b16 %v294
    %v321 = vunpack.c.l.b16 %v295
    %v322 = vunpack.c.l.b16 %v296
    %v323 = vpack.c.b16 %v320, %v319
    %v324 = vpack.c.b16 %v322, %v321
    %v328 = vsel %vm101, %v311, 0
    %v331 = vsel %vm101, %v312, 0
    %v334 = vsel %vm101, %v313, 0
    %v337 = vsel %vm101, %v314, 0
    %339 = vmatprep.subr.bf16.mxu0 0
    %340 = vmatpush1.bf16.msra.mxu0 0
    %341 = vmatprep.subr.bf16.mxu0 0
    %342 = vmatpush1.bf16.msra.mxu0 0
    %343 = vmatprep.subr.bf16.mxu0 0
    %344 = vmatpush1.bf16.msra.mxu0 0
    %345 = vmatprep.subr.bf16.mxu0 0
    %346 = vmatpush1.bf16.msra.mxu0 0
    %347 = vmatprep.subr.bf16.mxu0 0
    %348 = vmatpush1.bf16.msra.mxu0 0
    %349 = vmatprep.subr.bf16.mxu0 0
    %350 = vmatpush1.bf16.msra.mxu0 0
    %351 = vmatprep.subr.bf16.mxu0 0
    %352 = vmatpush1.bf16.msra.mxu0 %v324
    %353 = vmatprep.subr.bf16.mxu0 0
    %354 = vmatpush1.bf16.msra.mxu0 %v323
    %355 = vmatprep.subr.bf16.mxu0 0
    %356 = vmatpush2.bf16.msra.mxu0 0
    %357 = vmatprep.subr.bf16.mxu0 0
    %358 = vmatpush2.bf16.msra.mxu0 0
    %359 = vmatprep.subr.bf16.mxu0 0
    %360 = vmatpush2.bf16.msra.mxu0 0
    %361 = vmatprep.subr.bf16.mxu0 0
    %362 = vmatpush2.bf16.msra.mxu0 0
    %363 = vmatprep.subr.bf16.mxu0 0
    %364 = vmatpush2.bf16.msra.mxu0 0
    %365 = vmatprep.subr.bf16.mxu0 0
    %366 = vmatpush2.bf16.msra.mxu0 0
    %367 = vmatprep.subr.bf16.mxu0 0
    %368 = vmatpush2.bf16.msra.mxu0 0
    %369 = vmatprep.subr.bf16.mxu0 0
    %370 = vmatpush2.bf16.msra.mxu0 0
    %371 = vmatprep.mubr.bf16.mxu0 0
    %372 = vmatmul.mubr.bf16.gmra.mxu0 %v328
    %v373 = vpop.f32.mrf.mxu0
    %v374 = vadd.f32 0.0, %v373
    %v375 = vpop.f32.mrf.mxu0
    %v376 = vpop.f32.mrf.mxu0
    %v377 = vadd.f32 0.0, %v376
    %v378 = vpop.f32.mrf.mxu0
    %379 = vmatprep.mubr.bf16.mxu0 0
    %380 = vmatmul.mubr.bf16.gmra.mxu0 %v331
    %v381 = vpop.f32.mrf.mxu0
    %v382 = vadd.f32 0.0, %v381
    %v383 = vpop.f32.mrf.mxu0
    %v384 = vpop.f32.mrf.mxu0
    %v385 = vadd.f32 0.0, %v384
    %v386 = vpop.f32.mrf.mxu0
    %387 = vmatprep.mubr.bf16.mxu0 0
    %388 = vmatmul.mubr.bf16.gmra.mxu0 %v334
    %v389 = vpop.f32.mrf.mxu0
    %v390 = vadd.f32 0.0, %v389
    %v391 = vpop.f32.mrf.mxu0
    %v392 = vpop.f32.mrf.mxu0
    %v393 = vadd.f32 0.0, %v392
    %v394 = vpop.f32.mrf.mxu0
    %395 = vmatprep.mubr.bf16.mxu0 0
    %396 = vmatmul.mubr.bf16.gmra.mxu0 %v337
    %v397 = vpop.f32.mrf.mxu0
    %v398 = vadd.f32 0.0, %v397
    %v399 = vpop.f32.mrf.mxu0
    %v400 = vpop.f32.mrf.mxu0
    %v401 = vpop.f32.mrf.mxu0
    %402 = vdwg.mxu0
    %v403 = vadd.f32 %v255, %v374
    %v404 = vadd.f32 %v258, %v377
    %v405 = vadd.f32 %v263, %v382
    %v406 = vadd.f32 %v266, %v385
    %v407 = vadd.f32 %v271, %v390
    %v408 = vadd.f32 %v274, %v393
    %v409 = vadd.f32 %v279, %v398
    %v410 = vld [vmem:[%s3] sm:$0x7f]
    %v412 = vcombine.high %v410, %v410
    %v414 = vunpack.c.l.s4 1966171168
    %v415 = vunpack.c.0.s8 %v414
    %v416 = vlaneseq
    %v417 = vshrl.u32 %v416, 7
    %v418 = vsub.s32 %v415, %v417
    %v419 = vrot.slane %v410, %v418
    %v421 = vunpack.c.l.s4 1966171168
    %v422 = vunpack.c.0.s8 %v421
    %v423 = vlaneseq
    %v424 = vshrl.u32 %v423, 7
    %v425 = vsub.s32 %v422, %v424
    %v426 = vrot.slane %v412, %v425
    %v427 = vcombine.high %v419, %v419
    %v428 = vcombine.high %v426, %v426
    %v430 = vunpack.c.l.s4 1966171168
    %v431 = vunpack.c.0.s8 %v430
    %v432 = vlaneseq
    %v433 = vshrl.u32 %v432, 7
    %v434 = vsub.s32 %v431, %v433
    %v435 = vrot.slane %v419, %v434
    %v437 = vunpack.c.l.s4 1966171168
    %v438 = vunpack.c.0.s8 %v437
    %v439 = vlaneseq
    %v440 = vshrl.u32 %v439, 7
    %v441 = vsub.s32 %v438, %v440
    %v442 = vrot.slane %v426, %v441
    %v444 = vunpack.c.l.s4 1966171168
    %v445 = vunpack.c.0.s8 %v444
    %v446 = vlaneseq
    %v447 = vshrl.u32 %v446, 7
    %v448 = vsub.s32 %v445, %v447
    %v449 = vrot.slane %v427, %v448
    %v451 = vunpack.c.l.s4 1966171168
    %v452 = vunpack.c.0.s8 %v451
    %v453 = vlaneseq
    %v454 = vshrl.u32 %v453, 7
    %v455 = vsub.s32 %v452, %v454
    %v456 = vrot.slane %v428, %v455
    %v457 = vcombine.high %v435, %v435
    %v458 = vcombine.high %v442, %v442
    %v459 = vcombine.high %v449, %v449
    %v460 = vlaneseq
    %v461 = vshrl.u32 %v460, 7
    %v462 = vsub.s32 0, %v461
    %v463 = vrot.slane %v435, %v462
    %v464 = vlaneseq
    %v465 = vshrl.u32 %v464, 7
    %v466 = vsub.s32 0, %v465
    %v467 = vrot.slane %v449, %v466
    %v468 = vlaneseq
    %v469 = vshrl.u32 %v468, 7
    %v470 = vsub.s32 0, %v469
    %v471 = vrot.slane %v457, %v470
    %v472 = vlaneseq
    %v473 = vshrl.u32 %v472, 7
    %v474 = vsub.s32 0, %v473
    %v475 = vrot.slane %v459, %v474
    %v476 = vlaneseq
    %v477 = vshrl.u32 %v476, 7
    %v478 = vsub.s32 0, %v477
    %v479 = vrot.slane %v442, %v478
    %v480 = vlaneseq
    %v481 = vshrl.u32 %v480, 7
    %v482 = vsub.s32 0, %v481
    %v483 = vrot.slane %v456, %v482
    %v484 = vlaneseq
    %v485 = vshrl.u32 %v484, 7
    %v486 = vsub.s32 0, %v485
    %v487 = vrot.slane %v458, %v486
    %v495 = vadd.f32 %v403, %v463
    %v496 = vadd.f32 %v404, %v467
    %v497 = vadd.f32 %v405, %v471
    %v498 = vadd.f32 %v406, %v475
    %v499 = vadd.f32 %v407, %v479
    %v500 = vadd.f32 %v408, %v483
    %v501 = vadd.f32 %v409, %v487
    %v502 = vmax.f32 %v495, %v499
    %v503 = vmax.f32 %v496, %v500
    %v504 = vmax.f32 %v497, %v501
    %v505 = vmax.f32 %v502, %v503
    %v506 = vmax.f32 %v504, %v498
    %v507 = vmax.f32 %v505, %v506
    %v508 = vmax.f32 %v507, -1e+30
    %v509 = vld [vmem:[%s2] sm:$0x1]
    %v511 = vlaneseq
    %v512 = vshrl.u32 %v511, 7
    %v513 = vsub.s32 0, %v512
    %v514 = vrot.slane %v509, %v513
    %v516 = vadd.f32 %v508, %v514
    %v517 = vmax.f32 %v516, 0.0
    %518 = vst [vmem:[#allocation7] sm:$0xff] %v517
    // Predicated region
    $region26: #{tpu_custom_call.1} parent=1 // pred_check
      _
    $region27: #{tpu_custom_call.1} parent=1 // pred_check_branch
      %520 = sbr.rel (0) target = $region29
    $region28: #{tpu_custom_call.1} parent=1 // pred_region
      %s522 = ssub.s32 128, 128
      %523 = vsyncadd [#allocation4], %s522
      %s525 = sshll.u32 [#allocation7], 4
      %s526 = int_to_ptr.vmem [resolvable:$true] %s525
      %528 = dma.vmem_to_hbm [thread:$0]  %s526, 128, %s4, [#allocation4]
    $region29: #{tpu_custom_call.1} parent=1 // pred_fallthru
      _
    // Predicated region
    $region30: #{tpu_custom_call.1} parent=1 // pred_check
      _
    $region31: #{tpu_custom_call.1} parent=1 // pred_check_branch
      %530 = sbr.rel (0) target = $region33
    $region32: #{tpu_custom_call.1} parent=1 // pred_region
      %531 = dma.done [#allocation4], 128
    $region33: #{tpu_custom_call.1} parent=1 // pred_fallthru
      _
    %532 = vsyncpa [#allocation3], 1
    %533 = vsyncpa [#allocation6], 1
    %534 = vsyncpa [#allocation4], 1

</llo_original>
